<compile_context>
chip_gen: v7x
topology: tpu7x:2x2x1
jax: 0.10.0
libtpu: 0.0.40
codegen_flags: <defaults>
</compile_context>

<pallas_src>
import jax
import jax.numpy as jnp
from jax.experimental import pallas as pl
from jax.experimental.pallas import tpu as pltpu


def _round_up(x, m):
    return ((x + m - 1) // m) * m


def _mlp_kernel(x_ref,
                w1_ref, b1_ref,
                w2_ref, b2_ref,
                w3_ref, b3_ref,
                w4_ref, b4_ref,
                o_ref):
    """Fused 4-layer MLP on one feature-major batch tile.

    x_ref : (coords, tile_n)   float32   (batch on the 128-lane axis)
    w1_ref: (H, coords)        float32   (fc1 kept f32: K<=3, precision)
    wN_ref: (out_f, in_f)      compute_dtype (bf16 or f32) for fc2/fc3/preds
    bN_ref: (out_f, 1)         float32
    o_ref : (out_dim, tile_n)  out_dtype
    """
    cdt = w2_ref.dtype

    x = x_ref[...]                         # (coords, tile_n) f32
    coords = x.shape[0]

    # fc1 (K = coords <= 3): VPU broadcast-FMA in full f32.  A 3-deep MXU
    # contraction is fill/drain dominated and would force the coordinates
    # through bf16; three broadcast FMAs on the VALUs are ~free instead.
    # (Dropout(0.2) is identity at inference.)
    w1 = w1_ref[...]                       # (H, coords) f32
    h = b1_ref[...] + w1[:, 0:1] * x[0:1, :]
    for c in range(1, coords):             # static unroll, coords is tiny
        h = h + w1[:, c:c + 1] * x[c:c + 1, :]
    h = jnp.maximum(h, 0.0)

    # fc2: Linear + ReLU (Dropout(0.1) identity at inference). MXU, f32 acc.
    h = jnp.dot(w2_ref[...], h.astype(cdt), preferred_element_type=jnp.float32)
    h = jnp.maximum(h + b2_ref[...], 0.0)

    # fc3: Linear + ReLU.
    h = jnp.dot(w3_ref[...], h.astype(cdt), preferred_element_type=jnp.float32)
    h = jnp.maximum(h + b3_ref[...], 0.0)

    # preds: Linear, single lane-dense store of the (out_dim, tile_n) tile.
    y = jnp.dot(w4_ref[...], h.astype(cdt), preferred_element_type=jnp.float32)
    o_ref[...] = (y + b4_ref[...]).astype(o_ref.dtype)

    # TODO(synk): training-mode dropout (random masks + 1/(1-p) rescale) is
    # not implemented; forward here matches model.eval() semantics exactly.


def rans_model_single_point_fm(x_fm, params, *, tile_n=8192,
                               compute_dtype=jnp.bfloat16,
                               out_dtype=jnp.float32):
    """Feature-major entry point (no wrapper transposes, no padding pass).

    x_fm : (coords, N) float32.  Returns (out_dim, N) `out_dtype`.
    """
    coords, n = x_fm.shape
    hidden = params["w1"].shape[1]
    out_dim = params["w4"].shape[1]

    if x_fm.dtype != jnp.float32:
        x_fm = x_fm.astype(jnp.float32)

    # ---- batch-tile selection -------------------------------------------
    #  * multiple of 512 (lane axis of block_shape must be a multiple of 128)
    #  * large enough to amortize per-grid-step pipeline overhead
    #  * capped so the "parallel" grid axis has >= 2 steps whenever N allows,
    #    so both v7x TensorCores get work (harmless on 1-TC v5e/v6e).
    tile = max(512, _round_up(min(int(tile_n), max(n, 1)), 512))
    if n > 512:
        tile = min(tile, _round_up(pl.cdiv(n, 2), 512))
    n_tiles = pl.cdiv(n, tile)   # last block may be partial: Pallas masks the
                                 # OOB writeback; garbage tail columns never
                                 # mix across batch (contractions are over
                                 # the feature/sublane axis only).

    cd = compute_dtype
    out_itemsize = jnp.dtype(out_dtype).itemsize

    # PyTorch-native (out_features, in_features) weights, (out, 1) biases.
    # fc1 stays f32 (see kernel); hidden/output layers optionally bf16.
    w1 = params["w1"].T                    # (H, coords) f32
    b1 = params["b1"].T                    # (H, 1)      f32
    w2 = params["w2"].T.astype(cd); b2 = params["b2"].T
    w3 = params["w3"].T.astype(cd); b3 = params["b3"].T
    w4 = params["w4"].T.astype(cd); b4 = params["b4"].T

    full = lambda r, c: pl.BlockSpec((r, c), lambda i: (0, 0))
    in_specs = [
        pl.BlockSpec((coords, tile), lambda i: (0, i)),   # x tile (lane-dense)
        full(hidden, coords), full(hidden, 1),            # fc1
        full(hidden, hidden), full(hidden, 1),            # fc2
        full(hidden, hidden), full(hidden, 1),            # fc3
        full(out_dim, hidden), full(out_dim, 1),          # preds
    ]
    out_spec = pl.BlockSpec((out_dim, tile), lambda i: (0, i))

    # Advisory cost so XLA schedules surrounding ops to overlap with the call.
    flops = 2 * n * (coords * hidden + 2 * hidden * hidden + hidden * out_dim)
    w_bytes = 4 * hidden * (coords + 2 * hidden + out_dim) \
        + 4 * (3 * hidden + out_dim)
    cost = pl.CostEstimate(
        flops=int(flops), transcendentals=0,
        bytes_accessed=int(n * (coords * 4 + out_dim * out_itemsize) + w_bytes))

    # Right-sized VMEM limit: double-buffered x/out tiles + a generous hidden
    # activation working set + weights, with ~50% headroom (clamped).
    io_b = 2 * tile * (coords * 4 + out_dim * out_itemsize)
    act_b = 10 * hidden * tile * 4
    vmem_limit = int(min(max(1.5 * (io_b + act_b + 4 * w_bytes) + (2 << 20),
                             8 << 20), 56 << 20))

    out_fm = pl.pallas_call(
        _mlp_kernel,
        out_shape=jax.ShapeDtypeStruct((out_dim, n), out_dtype),
        grid_spec=pltpu.PrefetchScalarGridSpec(
            num_scalar_prefetch=0,
            grid=(n_tiles,),
            in_specs=in_specs,
            out_specs=out_spec,
        ),
        compiler_params=pltpu.CompilerParams(
            dimension_semantics=("parallel",),
            vmem_limit_bytes=vmem_limit,
        ),
        cost_estimate=cost,
    )(x_fm, w1, b1, w2, b2, w3, b3, w4, b4)
    return out_fm


def rans_model_single_point(t, params, **kwargs):
    """PyTorch-contract wrapper: t (N, coords) -> (N, out_dim).

    Prefer `rans_model_single_point_fm` (feature-major I/O) when the caller
    can provide/consume (features, N) arrays: it removes the two wrapper-side
    XLA transposes, which at large N cost as much HBM traffic as the kernel.
    """
    return rans_model_single_point_fm(t.T, params, **kwargs).T


def init_params(key, coords, hidden_dim, out_dim):
    """Deterministic init.  Weights stored (in, out); biases (1, out)."""
    ks = jax.random.split(key, 8)

    def linear(kw, kb, fan_in, fan_out):
        # PyTorch nn.Linear default: U(-1/sqrt(fan_in), 1/sqrt(fan_in))
        bound = 1.0 / jnp.sqrt(jnp.float32(fan_in))
        w = jax.random.uniform(kw, (fan_in, fan_out), jnp.float32, -bound, bound)
        b = jax.random.uniform(kb, (1, fan_out), jnp.float32, -bound, bound)
        return w, b

    w1, b1 = linear(ks[0], ks[1], coords, hidden_dim)
    w2, b2 = linear(ks[2], ks[3], hidden_dim, hidden_dim)
    w3, b3 = linear(ks[4], ks[5], hidden_dim, hidden_dim)
    w4, b4 = linear(ks[6], ks[7], hidden_dim, out_dim)
    return dict(w1=w1, b1=b1, w2=w2, b2=b2, w3=w3, b3=b3, w4=w4, b4=b4)


def _reference(t, p, compute_dtype=jnp.float32):
    """Pure-JAX reference matching the kernel's mixed-precision semantics
    (fc1 always f32; hidden layers in compute_dtype with f32 accumulation)."""
    h = jnp.maximum(jnp.dot(t, p["w1"]) + p["b1"], 0.0)   # fc1 in f32
    cd = compute_dtype

    def lin(x, w, b):
        return jnp.dot(x.astype(cd), w.astype(cd),
                       preferred_element_type=jnp.float32) + b

    h = jnp.maximum(lin(h, p["w2"], p["b2"]), 0.0)
    h = jnp.maximum(lin(h, p["w3"], p["b3"]), 0.0)
    return lin(h, p["w4"], p["b4"])


if __name__ == "__main__":
    # Shapes consistent with the module: 3 coords, hidden_dim=32, out_dim=4.
    COORDS, HIDDEN, OUT = 3, 32, 4

    key = jax.random.PRNGKey(0)
    k_in, k_par = jax.random.split(key)
    params = init_params(k_par, COORDS, HIDDEN, OUT)

    # fixed_coeffs buffer exists on the module but is unused in forward();
    # kept here only for shape parity.
    fixed_coeffs = jnp.ones((OUT,), dtype=jnp.float32)

    # n=16: single tile.  n=1000 with a small requested tile: multi-step grid
    # with a partial (masked) last block and >= 2 tiles (v7x both-TC path).
    for n, tile_n in ((16, 8192), (1000, 512)):
        t = jax.random.normal(k_in, (n, COORDS), dtype=jnp.float32)
        ref_f32 = _reference(t, params, jnp.float32)

        # f32 compute path (vs f32 reference).
        out_f32 = jax.block_until_ready(
            rans_model_single_point(t, params, tile_n=tile_n,
                                    compute_dtype=jnp.float32))
        assert out_f32.shape == (n, OUT)
        assert jnp.allclose(out_f32, ref_f32, atol=1e-4, rtol=1e-4)

        # bf16 hidden-layer path (fc1 stays f32; f32 accumulation).
        out_bf16 = jax.block_until_ready(
            rans_model_single_point(t, params, tile_n=tile_n,
                                    compute_dtype=jnp.bfloat16))
        ref_bf16 = _reference(t, params, jnp.bfloat16)
        assert out_bf16.shape == (n, OUT)
        assert jnp.allclose(out_bf16, ref_bf16, atol=5e-3, rtol=5e-3)
        assert jnp.allclose(out_bf16, ref_f32, atol=5e-2, rtol=5e-2)

        # Feature-major entry (no wrapper transposes) matches as well.
        out_fm = jax.block_until_ready(
            rans_model_single_point_fm(t.T, params, tile_n=tile_n,
                                       compute_dtype=jnp.float32))
        assert out_fm.shape == (OUT, n)
        assert jnp.allclose(out_fm.T, ref_f32, atol=1e-4, rtol=1e-4)

    print("KERNEL_OK")
</pallas_src>

<mosaic_0001>
module attributes {stable_mosaic.version = 11 : i64} {
  func.func @_mlp_kernel(%arg0: i32, %arg1: memref<3x512xf32, #tpu.memory_space<vmem>>, %arg2: memref<32x3xf32, #tpu.memory_space<vmem>>, %arg3: memref<32x1xf32, #tpu.memory_space<vmem>>, %arg4: memref<32x32xf32, #tpu.memory_space<vmem>>, %arg5: memref<32x1xf32, #tpu.memory_space<vmem>>, %arg6: memref<32x32xf32, #tpu.memory_space<vmem>>, %arg7: memref<32x1xf32, #tpu.memory_space<vmem>>, %arg8: memref<4x32xf32, #tpu.memory_space<vmem>>, %arg9: memref<4x1xf32, #tpu.memory_space<vmem>>, %arg10: memref<4x512xf32, #tpu.memory_space<vmem>>) attributes {dimension_semantics = [#tpu.dimension_semantics<parallel>], iteration_bounds = array<i64: 1>, scalar_prefetch = 0 : i64, scratch_operands = 0 : i64, tpu.core_type = #tpu.core_type<tc>, window_params = [{transform_indices = @transform_0, window_bounds = array<i64: 3, 512>}, {pipeline_mode = #tpu.pipeline_mode<synchronous>, transform_indices = @transform_1, window_bounds = array<i64: 32, 3>}, {pipeline_mode = #tpu.pipeline_mode<synchronous>, transform_indices = @transform_2, window_bounds = array<i64: 32, 1>}, {pipeline_mode = #tpu.pipeline_mode<synchronous>, transform_indices = @transform_3, window_bounds = array<i64: 32, 32>}, {pipeline_mode = #tpu.pipeline_mode<synchronous>, transform_indices = @transform_4, window_bounds = array<i64: 32, 1>}, {pipeline_mode = #tpu.pipeline_mode<synchronous>, transform_indices = @transform_5, window_bounds = array<i64: 32, 32>}, {pipeline_mode = #tpu.pipeline_mode<synchronous>, transform_indices = @transform_6, window_bounds = array<i64: 32, 1>}, {pipeline_mode = #tpu.pipeline_mode<synchronous>, transform_indices = @transform_7, window_bounds = array<i64: 4, 32>}, {pipeline_mode = #tpu.pipeline_mode<synchronous>, transform_indices = @transform_8, window_bounds = array<i64: 4, 1>}, {transform_indices = @transform_9, window_bounds = array<i64: 4, 512>}]} {
    %c0 = arith.constant 0 : index
    %c0_0 = arith.constant 0 : index
    %0 = vector.load %arg1[%c0, %c0_0] : memref<3x512xf32, #tpu.memory_space<vmem>>, vector<3x512xf32>
    %c0_1 = arith.constant 0 : index
    %c0_2 = arith.constant 0 : index
    %1 = vector.load %arg2[%c0_1, %c0_2] : memref<32x3xf32, #tpu.memory_space<vmem>>, vector<32x3xf32>
    %c0_3 = arith.constant 0 : index
    %c0_4 = arith.constant 0 : index
    %2 = vector.load %arg3[%c0_3, %c0_4] : memref<32x1xf32, #tpu.memory_space<vmem>>, vector<32x1xf32>
    %3 = vector.extract_strided_slice %1 {offsets = [0, 0], sizes = [32, 1], strides = [1, 1]} : vector<32x3xf32> to vector<32x1xf32>
    %4 = vector.extract_strided_slice %0 {offsets = [0, 0], sizes = [1, 512], strides = [1, 1]} : vector<3x512xf32> to vector<1x512xf32>
    %5 = vector.broadcast %3 : vector<32x1xf32> to vector<32x512xf32>
    %6 = vector.broadcast %4 : vector<1x512xf32> to vector<32x512xf32>
    %7 = arith.mulf %5, %6 : vector<32x512xf32>
    %8 = vector.broadcast %2 : vector<32x1xf32> to vector<32x512xf32>
    %9 = arith.addf %8, %7 : vector<32x512xf32>
    %10 = vector.extract_strided_slice %1 {offsets = [0, 1], sizes = [32, 1], strides = [1, 1]} : vector<32x3xf32> to vector<32x1xf32>
    %11 = vector.extract_strided_slice %0 {offsets = [1, 0], sizes = [1, 512], strides = [1, 1]} : vector<3x512xf32> to vector<1x512xf32>
    %12 = vector.broadcast %10 : vector<32x1xf32> to vector<32x512xf32>
    %13 = vector.broadcast %11 : vector<1x512xf32> to vector<32x512xf32>
    %14 = arith.mulf %12, %13 : vector<32x512xf32>
    %15 = arith.addf %9, %14 : vector<32x512xf32>
    %16 = vector.extract_strided_slice %1 {offsets = [0, 2], sizes = [32, 1], strides = [1, 1]} : vector<32x3xf32> to vector<32x1xf32>
    %17 = vector.extract_strided_slice %0 {offsets = [2, 0], sizes = [1, 512], strides = [1, 1]} : vector<3x512xf32> to vector<1x512xf32>
    %18 = vector.broadcast %16 : vector<32x1xf32> to vector<32x512xf32>
    %19 = vector.broadcast %17 : vector<1x512xf32> to vector<32x512xf32>
    %20 = arith.mulf %18, %19 : vector<32x512xf32>
    %21 = arith.addf %15, %20 : vector<32x512xf32>
    %cst = arith.constant 0.000000e+00 : f32
    %22 = vector.broadcast %cst : f32 to vector<32x512xf32>
    %23 = arith.maximumf %21, %22 : vector<32x512xf32>
    %c0_5 = arith.constant 0 : index
    %c0_6 = arith.constant 0 : index
    %24 = vector.load %arg4[%c0_5, %c0_6] : memref<32x32xf32, #tpu.memory_space<vmem>>, vector<32x32xf32>
    %cst_7 = arith.constant dense<0.000000e+00> : vector<32x512xf32>
    %25 = tpu.matmul %24, %23, %cst_7 {dimension_numbers = #tpu.dot_dimension_numbers<[1], [0], [0], [1], [0, 0, 1, 1], [], []>} : vector<32x32xf32>, vector<32x512xf32>, vector<32x512xf32> -> vector<32x512xf32>
    %c0_8 = arith.constant 0 : index
    %c0_9 = arith.constant 0 : index
    %26 = vector.load %arg5[%c0_8, %c0_9] : memref<32x1xf32, #tpu.memory_space<vmem>>, vector<32x1xf32>
    %27 = vector.broadcast %26 : vector<32x1xf32> to vector<32x512xf32>
    %28 = arith.addf %25, %27 : vector<32x512xf32>
    %cst_10 = arith.constant 0.000000e+00 : f32
    %29 = vector.broadcast %cst_10 : f32 to vector<32x512xf32>
    %30 = arith.maximumf %28, %29 : vector<32x512xf32>
    %c0_11 = arith.constant 0 : index
    %c0_12 = arith.constant 0 : index
    %31 = vector.load %arg6[%c0_11, %c0_12] : memref<32x32xf32, #tpu.memory_space<vmem>>, vector<32x32xf32>
    %cst_13 = arith.constant dense<0.000000e+00> : vector<32x512xf32>
    %32 = tpu.matmul %31, %30, %cst_13 {dimension_numbers = #tpu.dot_dimension_numbers<[1], [0], [0], [1], [0, 0, 1, 1], [], []>} : vector<32x32xf32>, vector<32x512xf32>, vector<32x512xf32> -> vector<32x512xf32>
    %c0_14 = arith.constant 0 : index
    %c0_15 = arith.constant 0 : index
    %33 = vector.load %arg7[%c0_14, %c0_15] : memref<32x1xf32, #tpu.memory_space<vmem>>, vector<32x1xf32>
    %34 = vector.broadcast %33 : vector<32x1xf32> to vector<32x512xf32>
    %35 = arith.addf %32, %34 : vector<32x512xf32>
    %cst_16 = arith.constant 0.000000e+00 : f32
    %36 = vector.broadcast %cst_16 : f32 to vector<32x512xf32>
    %37 = arith.maximumf %35, %36 : vector<32x512xf32>
    %c0_17 = arith.constant 0 : index
    %c0_18 = arith.constant 0 : index
    %38 = vector.load %arg8[%c0_17, %c0_18] : memref<4x32xf32, #tpu.memory_space<vmem>>, vector<4x32xf32>
    %cst_19 = arith.constant dense<0.000000e+00> : vector<4x512xf32>
    %39 = tpu.matmul %38, %37, %cst_19 {dimension_numbers = #tpu.dot_dimension_numbers<[1], [0], [0], [1], [0, 0, 1, 1], [], []>} : vector<4x32xf32>, vector<32x512xf32>, vector<4x512xf32> -> vector<4x512xf32>
    %c0_20 = arith.constant 0 : index
    %c0_21 = arith.constant 0 : index
    %40 = vector.load %arg9[%c0_20, %c0_21] : memref<4x1xf32, #tpu.memory_space<vmem>>, vector<4x1xf32>
    %41 = vector.broadcast %40 : vector<4x1xf32> to vector<4x512xf32>
    %42 = arith.addf %39, %41 : vector<4x512xf32>
    %c0_22 = arith.constant 0 : index
    %c0_23 = arith.constant 0 : index
    %43 = vector.load %arg10[%c0_22, %c0_23] : memref<4x512xf32, #tpu.memory_space<vmem>>, vector<4x512xf32>
    tpu.vector_store %arg10[%c0_22, %c0_23], %42 {strides = array<i32>} : memref<4x512xf32, #tpu.memory_space<vmem>>, vector<4x512xf32>,
    return
  }
  func.func @transform_0(%arg0: i32) -> (i32, i32) {
    %c0_i32 = arith.constant 0 : i32
    %c0_i32_0 = arith.constant 0 : i32
    return %c0_i32, %arg0 : i32, i32
  }
  func.func @transform_1(%arg0: i32) -> (i32, i32) {
    %c0_i32 = arith.constant 0 : i32
    %c0_i32_0 = arith.constant 0 : i32
    %c0_i32_1 = arith.constant 0 : i32
    return %c0_i32, %c0_i32_0 : i32, i32
  }
  func.func @transform_2(%arg0: i32) -> (i32, i32) {
    %c0_i32 = arith.constant 0 : i32
    %c0_i32_0 = arith.constant 0 : i32
    %c0_i32_1 = arith.constant 0 : i32
    return %c0_i32, %c0_i32_0 : i32, i32
  }
  func.func @transform_3(%arg0: i32) -> (i32, i32) {
    %c0_i32 = arith.constant 0 : i32
    %c0_i32_0 = arith.constant 0 : i32
    %c0_i32_1 = arith.constant 0 : i32
    return %c0_i32, %c0_i32_0 : i32, i32
  }
  func.func @transform_4(%arg0: i32) -> (i32, i32) {
    %c0_i32 = arith.constant 0 : i32
    %c0_i32_0 = arith.constant 0 : i32
    %c0_i32_1 = arith.constant 0 : i32
    return %c0_i32, %c0_i32_0 : i32, i32
  }
  func.func @transform_5(%arg0: i32) -> (i32, i32) {
    %c0_i32 = arith.constant 0 : i32
    %c0_i32_0 = arith.constant 0 : i32
    %c0_i32_1 = arith.constant 0 : i32
    return %c0_i32, %c0_i32_0 : i32, i32
  }
  func.func @transform_6(%arg0: i32) -> (i32, i32) {
    %c0_i32 = arith.constant 0 : i32
    %c0_i32_0 = arith.constant 0 : i32
    %c0_i32_1 = arith.constant 0 : i32
    return %c0_i32, %c0_i32_0 : i32, i32
  }
  func.func @transform_7(%arg0: i32) -> (i32, i32) {
    %c0_i32 = arith.constant 0 : i32
    %c0_i32_0 = arith.constant 0 : i32
    %c0_i32_1 = arith.constant 0 : i32
    return %c0_i32, %c0_i32_0 : i32, i32
  }
  func.func @transform_8(%arg0: i32) -> (i32, i32) {
    %c0_i32 = arith.constant 0 : i32
    %c0_i32_0 = arith.constant 0 : i32
    %c0_i32_1 = arith.constant 0 : i32
    return %c0_i32, %c0_i32_0 : i32, i32
  }
  func.func @transform_9(%arg0: i32) -> (i32, i32) {
    %c0_i32 = arith.constant 0 : i32
    %c0_i32_0 = arith.constant 0 : i32
    return %c0_i32, %arg0 : i32, i32
  }
}

</mosaic_0001>

<llo_original>
// kernel: tpu_custom_call.1
$region0: #{tpu_custom_call.1}
  #allocation0 [shape = 'u32[]', space=smem, size = 0x4, offset = 0x4, fixed_abs, tag = 'smem constant byte address 0x4 - core index']
  #allocation1 [shape = 'u32[144,128]{1,0:T(1,128)}', space=vmem, size = 0x12000, scoped, tag = 'internal scratch']
  %s0 = inlined_call_operand.vmem [shape: f32[3,16], index: 0, kind: input, shape index: {}]
  %s1 = inlined_call_operand.vmem [shape: f32[32,3], index: 1, kind: input, shape index: {}]
  %s2 = inlined_call_operand.vmem [shape: f32[32,1], index: 2, kind: input, shape index: {}]
  %s3 = inlined_call_operand.vmem [shape: f32[32,32], index: 3, kind: input, shape index: {}]
  %s4 = inlined_call_operand.vmem [shape: f32[32,1], index: 4, kind: input, shape index: {}]
  %s5 = inlined_call_operand.vmem [shape: f32[32,32], index: 5, kind: input, shape index: {}]
  %s6 = inlined_call_operand.vmem [shape: f32[32,1], index: 6, kind: input, shape index: {}]
  %s7 = inlined_call_operand.vmem [shape: f32[4,32], index: 7, kind: input, shape index: {}]
  %s8 = inlined_call_operand.vmem [shape: f32[4,1], index: 8, kind: input, shape index: {}]
  %s9 = inlined_call_operand.hbm [shape: f32[4,16], index: 9, kind: output, shape index: {}]
  %s10 = sld [smem:[#allocation0]]
  $region46: #{tpu_custom_call.1} parent=0
    _
  %s12 = ssub.s32 1, %s10
  %s13 = scalar_select 0, %s12, %s10
  $region1: #{tpu_custom_call.1} parent=0
    #allocation2 [shape = 'u8[8192]{0}', space=vmem, size = 0x2000, scoped, tag = 'output window, operand 0, single buffered']
    #allocation3 [shape = 's32[1]{0}', space=sflag, size = 0x4, scoped, tag = 'scoped memory for tpu_custom_call.1']
    %14 = vsyncpa [#allocation3], 0
    // Predicated region
    $region2: #{tpu_custom_call.1} parent=1 // pred_check
      _
    $region3: #{tpu_custom_call.1} parent=1 // pred_check_branch
      %16 = sbr.rel (0) target = $region5
    $region4: #{tpu_custom_call.1} parent=1 // pred_region
      _
    $region5: #{tpu_custom_call.1} parent=1 // pred_fallthru
      _
    // Predicated region
    $region6: #{tpu_custom_call.1} parent=1 // pred_check
      _
    $region7: #{tpu_custom_call.1} parent=1 // pred_check_branch
      %18 = sbr.rel (0) target = $region9
    $region8: #{tpu_custom_call.1} parent=1 // pred_region
      _
    $region9: #{tpu_custom_call.1} parent=1 // pred_fallthru
      _
    // Predicated region
    $region10: #{tpu_custom_call.1} parent=1 // pred_check
      _
    $region11: #{tpu_custom_call.1} parent=1 // pred_check_branch
      %20 = sbr.rel (0) target = $region13
    $region12: #{tpu_custom_call.1} parent=1 // pred_region
      _
    $region13: #{tpu_custom_call.1} parent=1 // pred_fallthru
      _
    // Predicated region
    $region14: #{tpu_custom_call.1} parent=1 // pred_check
      _
    $region15: #{tpu_custom_call.1} parent=1 // pred_check_branch
      %22 = sbr.rel (0) target = $region17
    $region16: #{tpu_custom_call.1} parent=1 // pred_region
      _
    $region17: #{tpu_custom_call.1} parent=1 // pred_fallthru
      _
    // Predicated region
    $region18: #{tpu_custom_call.1} parent=1 // pred_check
      _
    $region19: #{tpu_custom_call.1} parent=1 // pred_check_branch
      %24 = sbr.rel (0) target = $region21
    $region20: #{tpu_custom_call.1} parent=1 // pred_region
      _
    $region21: #{tpu_custom_call.1} parent=1 // pred_fallthru
      _
    // Predicated region
    $region22: #{tpu_custom_call.1} parent=1 // pred_check
      _
    $region23: #{tpu_custom_call.1} parent=1 // pred_check_branch
      %26 = sbr.rel (0) target = $region25
    $region24: #{tpu_custom_call.1} parent=1 // pred_region
      _
    $region25: #{tpu_custom_call.1} parent=1 // pred_fallthru
      _
    // Predicated region
    $region26: #{tpu_custom_call.1} parent=1 // pred_check
      _
    $region27: #{tpu_custom_call.1} parent=1 // pred_check_branch
      %28 = sbr.rel (0) target = $region29
    $region28: #{tpu_custom_call.1} parent=1 // pred_region
      _
    $region29: #{tpu_custom_call.1} parent=1 // pred_fallthru
      _
    // Predicated region
    $region30: #{tpu_custom_call.1} parent=1 // pred_check
      _
    $region31: #{tpu_custom_call.1} parent=1 // pred_check_branch
      %30 = sbr.rel (0) target = $region33
    $region32: #{tpu_custom_call.1} parent=1 // pred_region
      _
    $region33: #{tpu_custom_call.1} parent=1 // pred_fallthru
      _
    // Predicated region
    $region34: #{tpu_custom_call.1} parent=1 // pred_check
      _
    $region35: #{tpu_custom_call.1} parent=1 // pred_check_branch
      %32 = sbr.rel (0) target = $region37
    $region36: #{tpu_custom_call.1} parent=1 // pred_region
      _
    $region37: #{tpu_custom_call.1} parent=1 // pred_fallthru
      _
    %v33 = vld [vmem:[%s0] sm:$0x77]
    %v34 = vld [vmem:[%s0 + $0x8] sm:$0x77]
    %v35 = vld [vmem:[%s1] sm:$0xff]
    %v36 = vld [vmem:[%s1 + $0x8] sm:$0xff]
    %v37 = vld [vmem:[%s1 + $0x10] sm:$0xff]
    %v38 = vld [vmem:[%s1 + $0x18] sm:$0xff]
    %v39 = vld [vmem:[%s2] sm:$0xff]
    %v40 = vld [vmem:[%s2 + $0x8] sm:$0xff]
    %v41 = vld [vmem:[%s2 + $0x10] sm:$0xff]
    %v42 = vld [vmem:[%s2 + $0x18] sm:$0xff]
    %44 = vset.pattern.permute.xlu0 0
    %45 = vperm.xlu0 %44, %v35
    %v46 = vpop.permute.xlu0 %45
    %49 = vset.pattern.permute.xlu0 0
    %50 = vperm.xlu0 %49, %v36
    %v51 = vpop.permute.xlu0 %50
    %54 = vset.pattern.permute.xlu0 0
    %55 = vperm.xlu0 %54, %v37
    %v56 = vpop.permute.xlu0 %55
    %59 = vset.pattern.permute.xlu0 0
    %60 = vperm.xlu0 %59, %v38
    %v61 = vpop.permute.xlu0 %60
    %v65 = vlaneseq
    %v66 = vshrl.u32 %v65, 7
    %v67 = vsub.s32 0, %v66
    %v68 = vrot.slane %v33, %v67
    %v69 = vlaneseq
    %v70 = vshrl.u32 %v69, 7
    %v71 = vsub.s32 4, %v70
    %v72 = vrot.slane %v33, %v71
    %v73 = vlaneseq
    %v74 = vshrl.u32 %v73, 7
    %v75 = vsub.s32 0, %v74
    %v76 = vrot.slane %v34, %v75
    %v77 = vlaneseq
    %v78 = vshrl.u32 %v77, 7
    %v79 = vsub.s32 4, %v78
    %v80 = vrot.slane %v34, %v79
    %v85 = vlaneseq
    %v86 = vshrl.u32 %v85, 7
    %v87 = vsub.s32 0, %v86
    %v88 = vrot.slane %v68, %v87
    %v89 = vlaneseq
    %v90 = vshrl.u32 %v89, 7
    %v91 = vsub.s32 0, %v90
    %v92 = vrot.slane %v72, %v91
    %v93 = vlaneseq
    %v94 = vshrl.u32 %v93, 7
    %v95 = vsub.s32 0, %v94
    %v96 = vrot.slane %v76, %v95
    %v97 = vlaneseq
    %v98 = vshrl.u32 %v97, 7
    %v99 = vsub.s32 0, %v98
    %v100 = vrot.slane %v80, %v99
    %v101 = vmul.f32 %v46, %v88
    %v102 = vmul.f32 %v46, %v92
    %v103 = vmul.f32 %v46, %v96
    %v104 = vmul.f32 %v46, %v100
    %v105 = vmul.f32 %v51, %v88
    %v106 = vmul.f32 %v51, %v92
    %v107 = vmul.f32 %v51, %v96
    %v108 = vmul.f32 %v51, %v100
    %v109 = vmul.f32 %v56, %v88
    %v110 = vmul.f32 %v56, %v92
    %v111 = vmul.f32 %v56, %v96
    %v112 = vmul.f32 %v56, %v100
    %v113 = vmul.f32 %v61, %v88
    %v114 = vmul.f32 %v61, %v92
    %v115 = vmul.f32 %v61, %v96
    %v116 = vmul.f32 %v61, %v100
    %118 = vset.pattern.permute.xlu0 0
    %119 = vperm.xlu0 %118, %v39
    %v120 = vpop.permute.xlu0 %119
    %123 = vset.pattern.permute.xlu0 0
    %124 = vperm.xlu0 %123, %v40
    %v125 = vpop.permute.xlu0 %124
    %128 = vset.pattern.permute.xlu0 0
    %129 = vperm.xlu0 %128, %v41
    %v130 = vpop.permute.xlu0 %129
    %133 = vset.pattern.permute.xlu0 0
    %134 = vperm.xlu0 %133, %v42
    %v135 = vpop.permute.xlu0 %134
    %v137 = vadd.f32 %v120, %v101
    %v138 = vadd.f32 %v120, %v102
    %v139 = vadd.f32 %v120, %v103
    %v140 = vadd.f32 %v120, %v104
    %v141 = vadd.f32 %v125, %v105
    %v142 = vadd.f32 %v125, %v106
    %v143 = vadd.f32 %v125, %v107
    %v144 = vadd.f32 %v125, %v108
    %v145 = vadd.f32 %v130, %v109
    %v146 = vadd.f32 %v130, %v110
    %v147 = vadd.f32 %v130, %v111
    %v148 = vadd.f32 %v130, %v112
    %v149 = vadd.f32 %v135, %v113
    %v150 = vadd.f32 %v135, %v114
    %v151 = vadd.f32 %v135, %v115
    %v152 = vadd.f32 %v135, %v116
    %153 = vset.pattern.permute.xlu0 1
    %154 = vperm.xlu0 %153, %v35
    %v155 = vpop.permute.xlu0 %154
    %157 = vset.pattern.permute.xlu0 1
    %158 = vperm.xlu0 %157, %v36
    %v159 = vpop.permute.xlu0 %158
    %161 = vset.pattern.permute.xlu0 1
    %162 = vperm.xlu0 %161, %v37
    %v163 = vpop.permute.xlu0 %162
    %165 = vset.pattern.permute.xlu0 1
    %166 = vperm.xlu0 %165, %v38
    %v167 = vpop.permute.xlu0 %166
    %v169 = vlaneseq
    %v170 = vshrl.u32 %v169, 7
    %v171 = vsub.s32 1, %v170
    %v172 = vrot.slane %v33, %v171
    %v173 = vlaneseq
    %v174 = vshrl.u32 %v173, 7
    %v175 = vsub.s32 5, %v174
    %v176 = vrot.slane %v33, %v175
    %v177 = vlaneseq
    %v178 = vshrl.u32 %v177, 7
    %v179 = vsub.s32 1, %v178
    %v180 = vrot.slane %v34, %v179
    %v181 = vlaneseq
    %v182 = vshrl.u32 %v181, 7
    %v183 = vsub.s32 5, %v182
    %v184 = vrot.slane %v34, %v183
    %v189 = vlaneseq
    %v190 = vshrl.u32 %v189, 7
    %v191 = vsub.s32 1, %v190
    %v192 = vrot.slane %v172, %v191
    %v193 = vlaneseq
    %v194 = vshrl.u32 %v193, 7
    %v195 = vsub.s32 1, %v194
    %v196 = vrot.slane %v176, %v195
    %v197 = vlaneseq
    %v198 = vshrl.u32 %v197, 7
    %v199 = vsub.s32 1, %v198
    %v200 = vrot.slane %v180, %v199
    %v201 = vlaneseq
    %v202 = vshrl.u32 %v201, 7
    %v203 = vsub.s32 1, %v202
    %v204 = vrot.slane %v184, %v203
    %v205 = vmul.f32 %v155, %v192
    %v206 = vmul.f32 %v155, %v196
    %v207 = vmul.f32 %v155, %v200
    %v208 = vmul.f32 %v155, %v204
    %v209 = vmul.f32 %v159, %v192
    %v210 = vmul.f32 %v159, %v196
    %v211 = vmul.f32 %v159, %v200
    %v212 = vmul.f32 %v159, %v204
    %v213 = vmul.f32 %v163, %v192
    %v214 = vmul.f32 %v163, %v196
    %v215 = vmul.f32 %v163, %v200
    %v216 = vmul.f32 %v163, %v204
    %v217 = vmul.f32 %v167, %v192
    %v218 = vmul.f32 %v167, %v196
    %v219 = vmul.f32 %v167, %v200
    %v220 = vmul.f32 %v167, %v204
    %v221 = vadd.f32 %v137, %v205
    %v222 = vadd.f32 %v138, %v206
    %v223 = vadd.f32 %v139, %v207
    %v224 = vadd.f32 %v140, %v208
    %v225 = vadd.f32 %v141, %v209
    %v226 = vadd.f32 %v142, %v210
    %v227 = vadd.f32 %v143, %v211
    %v228 = vadd.f32 %v144, %v212
    %v229 = vadd.f32 %v145, %v213
    %v230 = vadd.f32 %v146, %v214
    %v231 = vadd.f32 %v147, %v215
    %v232 = vadd.f32 %v148, %v216
    %v233 = vadd.f32 %v149, %v217
    %v234 = vadd.f32 %v150, %v218
    %v235 = vadd.f32 %v151, %v219
    %v236 = vadd.f32 %v152, %v220
    %237 = vset.pattern.permute.xlu0 2
    %238 = vperm.xlu0 %237, %v35
    %v239 = vpop.permute.xlu0 %238
    %241 = vset.pattern.permute.xlu0 2
    %242 = vperm.xlu0 %241, %v36
    %v243 = vpop.permute.xlu0 %242
    %245 = vset.pattern.permute.xlu0 2
    %246 = vperm.xlu0 %245, %v37
    %v247 = vpop.permute.xlu0 %246
    %249 = vset.pattern.permute.xlu0 2
    %250 = vperm.xlu0 %249, %v38
    %v251 = vpop.permute.xlu0 %250
    %v253 = vlaneseq
    %v254 = vshrl.u32 %v253, 7
    %v255 = vsub.s32 2, %v254
    %v256 = vrot.slane %v33, %v255
    %v257 = vlaneseq
    %v258 = vshrl.u32 %v257, 7
    %v259 = vsub.s32 6, %v258
    %v260 = vrot.slane %v33, %v259
    %v261 = vlaneseq
    %v262 = vshrl.u32 %v261, 7
    %v263 = vsub.s32 2, %v262
    %v264 = vrot.slane %v34, %v263
    %v265 = vlaneseq
    %v266 = vshrl.u32 %v265, 7
    %v267 = vsub.s32 6, %v266
    %v268 = vrot.slane %v34, %v267
    %v273 = vlaneseq
    %v274 = vshrl.u32 %v273, 7
    %v275 = vsub.s32 2, %v274
    %v276 = vrot.slane %v256, %v275
    %v277 = vlaneseq
    %v278 = vshrl.u32 %v277, 7
    %v279 = vsub.s32 2, %v278
    %v280 = vrot.slane %v260, %v279
    %v281 = vlaneseq
    %v282 = vshrl.u32 %v281, 7
    %v283 = vsub.s32 2, %v282
    %v284 = vrot.slane %v264, %v283
    %v285 = vlaneseq
    %v286 = vshrl.u32 %v285, 7
    %v287 = vsub.s32 2, %v286
    %v288 = vrot.slane %v268, %v287
    %v289 = vmul.f32 %v239, %v276
    %v290 = vmul.f32 %v239, %v280
    %v291 = vmul.f32 %v239, %v284
    %v292 = vmul.f32 %v239, %v288
    %v293 = vmul.f32 %v243, %v276
    %v294 = vmul.f32 %v243, %v280
    %v295 = vmul.f32 %v243, %v284
    %v296 = vmul.f32 %v243, %v288
    %v297 = vmul.f32 %v247, %v276
    %v298 = vmul.f32 %v247, %v280
    %v299 = vmul.f32 %v247, %v284
    %v300 = vmul.f32 %v247, %v288
    %v301 = vmul.f32 %v251, %v276
    %v302 = vmul.f32 %v251, %v280
    %v303 = vmul.f32 %v251, %v284
    %v304 = vmul.f32 %v251, %v288
    %v305 = vadd.f32 %v221, %v289
    %v306 = vadd.f32 %v222, %v290
    %v307 = vadd.f32 %v223, %v291
    %v308 = vadd.f32 %v224, %v292
    %v309 = vadd.f32 %v225, %v293
    %v310 = vadd.f32 %v226, %v294
    %v311 = vadd.f32 %v227, %v295
    %v312 = vadd.f32 %v228, %v296
    %v313 = vadd.f32 %v229, %v297
    %v314 = vadd.f32 %v230, %v298
    %v315 = vadd.f32 %v231, %v299
    %v316 = vadd.f32 %v232, %v300
    %v317 = vadd.f32 %v233, %v301
    %v318 = vadd.f32 %v234, %v302
    %v319 = vadd.f32 %v235, %v303
    %v320 = vadd.f32 %v236, %v304
    %v321 = vmax.f32 %v305, 0.0
    %v322 = vmax.f32 %v306, 0.0
    %v323 = vmax.f32 %v307, 0.0
    %v324 = vmax.f32 %v308, 0.0
    %v325 = vmax.f32 %v309, 0.0
    %v326 = vmax.f32 %v310, 0.0
    %v327 = vmax.f32 %v311, 0.0
    %v328 = vmax.f32 %v312, 0.0
    %v329 = vmax.f32 %v313, 0.0
    %v330 = vmax.f32 %v314, 0.0
    %v331 = vmax.f32 %v315, 0.0
    %v332 = vmax.f32 %v316, 0.0
    %v333 = vmax.f32 %v317, 0.0
    %v334 = vmax.f32 %v318, 0.0
    %v335 = vmax.f32 %v319, 0.0
    %v336 = vmax.f32 %v320, 0.0
    %v337 = vld [vmem:[%s3] sm:$0xff]
    %v338 = vld [vmem:[%s3 + $0x8] sm:$0xff]
    %v339 = vld [vmem:[%s3 + $0x10] sm:$0xff]
    %v340 = vld [vmem:[%s3 + $0x18] sm:$0xff]
    %v341 = vld [vmem:[%s4] sm:$0xff]
    %v342 = vld [vmem:[%s4 + $0x8] sm:$0xff]
    %v343 = vld [vmem:[%s4 + $0x10] sm:$0xff]
    %v344 = vld [vmem:[%s4 + $0x18] sm:$0xff]
    %346 = vset.pattern.permute.xlu0 0
    %347 = vperm.xlu0 %346, %v341
    %v348 = vpop.permute.xlu0 %347
    %351 = vset.pattern.permute.xlu0 0
    %352 = vperm.xlu0 %351, %v342
    %v353 = vpop.permute.xlu0 %352
    %356 = vset.pattern.permute.xlu0 0
    %357 = vperm.xlu0 %356, %v343
    %v358 = vpop.permute.xlu0 %357
    %361 = vset.pattern.permute.xlu0 0
    %362 = vperm.xlu0 %361, %v344
    %v363 = vpop.permute.xlu0 %362
    %vm365 = vcmask 261120
    %v367 = vsel %vm365, %v337, 0
    %v370 = vsel %vm365, %v338, 0
    %v373 = vsel %vm365, %v339, 0
    %v376 = vsel %vm365, %v340, 0
    %378 = vmatprep.subr.mxu0 %v322
    %379 = vmatpush1.msra.mxu0 %v321
    %380 = vmatprep.subr.mxu0 %v326
    %381 = vmatpush1.msra.mxu0 %v325
    %382 = vmatprep.subr.mxu0 %v330
    %383 = vmatpush1.msra.mxu0 %v329
    %384 = vmatprep.subr.mxu0 %v334
    %385 = vmatpush1.msra.mxu0 %v333
    %386 = vmatprep.subr.mxu0 0.0
    %387 = vmatpush1.msra.mxu0 0.0
    %388 = vmatprep.subr.mxu0 0.0
    %389 = vmatpush1.msra.mxu0 0.0
    %390 = vmatprep.subr.mxu0 0.0
    %391 = vmatpush1.msra.mxu0 0.0
    %392 = vmatprep.subr.mxu0 0.0
    %393 = vmatpush1.msra.mxu0 0.0
    %394 = vmatprep.subr.mxu0 0.0
    %395 = vmatpush1.msra.mxu0 0.0
    %396 = vmatprep.subr.mxu0 0.0
    %397 = vmatpush1.msra.mxu0 0.0
    %398 = vmatprep.subr.mxu0 0.0
    %399 = vmatpush1.msra.mxu0 0.0
    %400 = vmatprep.subr.mxu0 0.0
    %401 = vmatpush1.msra.mxu0 0.0
    %402 = vmatprep.subr.mxu0 0.0
    %403 = vmatpush1.msra.mxu0 0.0
    %404 = vmatprep.subr.mxu0 0.0
    %405 = vmatpush1.msra.mxu0 0.0
    %406 = vmatprep.subr.mxu0 0.0
    %407 = vmatpush1.msra.mxu0 0.0
    %408 = vmatprep.subr.mxu0 0.0
    %409 = vmatpush1.msra.mxu0 0.0
    %410 = vmatprep.subr.mxu0 0.0
    %411 = vmatpush1.msra.mxu0 0.0
    %412 = vmatprep.subr.mxu0 0.0
    %413 = vmatpush1.msra.mxu0 0.0
    %414 = vmatprep.subr.mxu0 0.0
    %415 = vmatpush1.msra.mxu0 0.0
    %416 = vmatprep.subr.mxu0 0.0
    %417 = vmatpush1.msra.mxu0 0.0
    %418 = vmatprep.subr.mxu0 0.0
    %419 = vmatpush1.msra.mxu0 0.0
    %420 = vmatprep.subr.mxu0 0.0
    %421 = vmatpush1.msra.mxu0 0.0
    %422 = vmatprep.subr.mxu0 0.0
    %423 = vmatpush1.msra.mxu0 0.0
    %424 = vmatprep.subr.mxu0 0.0
    %425 = vmatpush1.msra.mxu0 0.0
    %426 = vmatprep.subr.mxu0 0.0
    %427 = vmatpush1.msra.mxu0 0.0
    %428 = vmatprep.subr.mxu0 0.0
    %429 = vmatpush1.msra.mxu0 0.0
    %430 = vmatprep.subr.mxu0 0.0
    %431 = vmatpush1.msra.mxu0 0.0
    %432 = vmatprep.subr.mxu0 0.0
    %433 = vmatpush1.msra.mxu0 0.0
    %434 = vmatprep.subr.mxu0 0.0
    %435 = vmatpush1.msra.mxu0 0.0
    %436 = vmatprep.subr.mxu0 0.0
    %437 = vmatpush1.msra.mxu0 0.0
    %438 = vmatprep.subr.mxu0 0.0
    %439 = vmatpush1.msra.mxu0 0.0
    %440 = vmatprep.subr.mxu0 0.0
    %441 = vmatpush1.msra.mxu0 0.0
    %442 = vmatprep.mubr.f32.mxu0 0.0
    %443 = vmatmul.mubr.f32.gmra.mrb[0].mxu0 %v367
    %v444 = vpop.f32.mrb[0].mxu0
    %v445 = vadd.f32 %v348, %v444
    %v446 = vpop.f32.mrb[0].mxu0
    %v447 = vadd.f32 %v348, %v446
    %448 = vmatprep.mubr.f32.mxu0 0.0
    %449 = vmatmul.mubr.f32.gmra.mrb[0].mxu0 %v370
    %v450 = vpop.f32.mrb[0].mxu0
    %v451 = vadd.f32 %v353, %v450
    %v452 = vpop.f32.mrb[0].mxu0
    %v453 = vadd.f32 %v353, %v452
    %454 = vmatprep.mubr.f32.mxu0 0.0
    %455 = vmatmul.mubr.f32.gmra.mrb[0].mxu0 %v373
    %v456 = vpop.f32.mrb[0].mxu0
    %v457 = vadd.f32 %v358, %v456
    %v458 = vpop.f32.mrb[0].mxu0
    %v459 = vadd.f32 %v358, %v458
    %460 = vmatprep.mubr.f32.mxu0 0.0
    %461 = vmatmul.mubr.f32.gmra.mrb[0].mxu0 %v376
    %v462 = vpop.f32.mrb[0].mxu0
    %v463 = vadd.f32 %v363, %v462
    %v464 = vpop.f32.mrb[0].mxu0
    %v465 = vadd.f32 %v363, %v464
    %466 = vdwg.mxu0
    %467 = vmatprep.subr.mxu0 %v324
    %468 = vmatpush1.msra.mxu0 %v323
    %469 = vmatprep.subr.mxu0 %v328
    %470 = vmatpush1.msra.mxu0 %v327
    %471 = vmatprep.subr.mxu0 %v332
    %472 = vmatpush1.msra.mxu0 %v331
    %473 = vmatprep.subr.mxu0 %v336
    %474 = vmatpush1.msra.mxu0 %v335
    %475 = vmatprep.subr.mxu0 0.0
    %476 = vmatpush1.msra.mxu0 0.0
    %477 = vmatprep.subr.mxu0 0.0
    %478 = vmatpush1.msra.mxu0 0.0
    %479 = vmatprep.subr.mxu0 0.0
    %480 = vmatpush1.msra.mxu0 0.0
    %481 = vmatprep.subr.mxu0 0.0
    %482 = vmatpush1.msra.mxu0 0.0
    %483 = vmatprep.subr.mxu0 0.0
    %484 = vmatpush1.msra.mxu0 0.0
    %485 = vmatprep.subr.mxu0 0.0
    %486 = vmatpush1.msra.mxu0 0.0
    %487 = vmatprep.subr.mxu0 0.0
    %488 = vmatpush1.msra.mxu0 0.0
    %489 = vmatprep.subr.mxu0 0.0
    %490 = vmatpush1.msra.mxu0 0.0
    %491 = vmatprep.subr.mxu0 0.0
    %492 = vmatpush1.msra.mxu0 0.0
    %493 = vmatprep.subr.mxu0 0.0
    %494 = vmatpush1.msra.mxu0 0.0
    %495 = vmatprep.subr.mxu0 0.0
    %496 = vmatpush1.msra.mxu0 0.0
    %497 = vmatprep.subr.mxu0 0.0
    %498 = vmatpush1.msra.mxu0 0.0
    %499 = vmatprep.subr.mxu0 0.0
    %500 = vmatpush1.msra.mxu0 0.0
    %501 = vmatprep.subr.mxu0 0.0
    %502 = vmatpush1.msra.mxu0 0.0
    %503 = vmatprep.subr.mxu0 0.0
    %504 = vmatpush1.msra.mxu0 0.0
    %505 = vmatprep.subr.mxu0 0.0
    %506 = vmatpush1.msra.mxu0 0.0
    %507 = vmatprep.subr.mxu0 0.0
    %508 = vmatpush1.msra.mxu0 0.0
    %509 = vmatprep.subr.mxu0 0.0
    %510 = vmatpush1.msra.mxu0 0.0
    %511 = vmatprep.subr.mxu0 0.0
    %512 = vmatpush1.msra.mxu0 0.0
    %513 = vmatprep.subr.mxu0 0.0
    %514 = vmatpush1.msra.mxu0 0.0
    %515 = vmatprep.subr.mxu0 0.0
    %516 = vmatpush1.msra.mxu0 0.0
    %517 = vmatprep.subr.mxu0 0.0
    %518 = vmatpush1.msra.mxu0 0.0
    %519 = vmatprep.subr.mxu0 0.0
    %520 = vmatpush1.msra.mxu0 0.0
    %521 = vmatprep.subr.mxu0 0.0
    %522 = vmatpush1.msra.mxu0 0.0
    %523 = vmatprep.subr.mxu0 0.0
    %524 = vmatpush1.msra.mxu0 0.0
    %525 = vmatprep.subr.mxu0 0.0
    %526 = vmatpush1.msra.mxu0 0.0
    %527 = vmatprep.subr.mxu0 0.0
    %528 = vmatpush1.msra.mxu0 0.0
    %529 = vmatprep.subr.mxu0 0.0
    %530 = vmatpush1.msra.mxu0 0.0
    %531 = vmatprep.mubr.f32.mxu0 0.0
    %532 = vmatmul.mubr.f32.gmra.mrb[0].mxu0 %v367
    %v533 = vpop.f32.mrb[0].mxu0
    %v534 = vadd.f32 %v348, %v533
    %v535 = vpop.f32.mrb[0].mxu0
    %v536 = vadd.f32 %v348, %v535
    %537 = vmatprep.mubr.f32.mxu0 0.0
    %538 = vmatmul.mubr.f32.gmra.mrb[0].mxu0 %v370
    %v539 = vpop.f32.mrb[0].mxu0
    %v540 = vadd.f32 %v353, %v539
    %v541 = vpop.f32.mrb[0].mxu0
    %v542 = vadd.f32 %v353, %v541
    %543 = vmatprep.mubr.f32.mxu0 0.0
    %544 = vmatmul.mubr.f32.gmra.mrb[0].mxu0 %v373
    %v545 = vpop.f32.mrb[0].mxu0
    %v546 = vadd.f32 %v358, %v545
    %v547 = vpop.f32.mrb[0].mxu0
    %v548 = vadd.f32 %v358, %v547
    %549 = vmatprep.mubr.f32.mxu0 0.0
    %550 = vmatmul.mubr.f32.gmra.mrb[0].mxu0 %v376
    %v551 = vpop.f32.mrb[0].mxu0
    %v552 = vadd.f32 %v363, %v551
    %v553 = vpop.f32.mrb[0].mxu0
    %v554 = vadd.f32 %v363, %v553
    %555 = vdwg.mxu0
    %v556 = vmax.f32 %v445, 0.0
    %v557 = vmax.f32 %v447, 0.0
    %v558 = vmax.f32 %v534, 0.0
    %v559 = vmax.f32 %v536, 0.0
    %v560 = vmax.f32 %v451, 0.0
    %v561 = vmax.f32 %v453, 0.0
    %v562 = vmax.f32 %v540, 0.0
    %v563 = vmax.f32 %v542, 0.0
    %v564 = vmax.f32 %v457, 0.0
    %v565 = vmax.f32 %v459, 0.0
    %v566 = vmax.f32 %v546, 0.0
    %v567 = vmax.f32 %v548, 0.0
    %v568 = vmax.f32 %v463, 0.0
    %v569 = vmax.f32 %v465, 0.0
    %v570 = vmax.f32 %v552, 0.0
    %v571 = vmax.f32 %v554, 0.0
    %v572 = vld [vmem:[%s5] sm:$0xff]
    %v573 = vld [vmem:[%s5 + $0x8] sm:$0xff]
    %v574 = vld [vmem:[%s5 + $0x10] sm:$0xff]
    %v575 = vld [vmem:[%s5 + $0x18] sm:$0xff]
    %v576 = vld [vmem:[%s6] sm:$0xff]
    %v577 = vld [vmem:[%s6 + $0x8] sm:$0xff]
    %v578 = vld [vmem:[%s6 + $0x10] sm:$0xff]
    %v579 = vld [vmem:[%s6 + $0x18] sm:$0xff]
    %581 = vset.pattern.permute.xlu0 0
    %582 = vperm.xlu0 %581, %v576
    %v583 = vpop.permute.xlu0 %582
    %586 = vset.pattern.permute.xlu0 0
    %587 = vperm.xlu0 %586, %v577
    %v588 = vpop.permute.xlu0 %587
    %591 = vset.pattern.permute.xlu0 0
    %592 = vperm.xlu0 %591, %v578
    %v593 = vpop.permute.xlu0 %592
    %596 = vset.pattern.permute.xlu0 0
    %597 = vperm.xlu0 %596, %v579
    %v598 = vpop.permute.xlu0 %597
    %v601 = vsel %vm365, %v572, 0
    %v604 = vsel %vm365, %v573, 0
    %v607 = vsel %vm365, %v574, 0
    %v610 = vsel %vm365, %v575, 0
    %612 = vmatprep.subr.mxu0 %v557
    %613 = vmatpush1.msra.mxu0 %v556
    %614 = vmatprep.subr.mxu0 %v561
    %615 = vmatpush1.msra.mxu0 %v560
    %616 = vmatprep.subr.mxu0 %v565
    %617 = vmatpush1.msra.mxu0 %v564
    %618 = vmatprep.subr.mxu0 %v569
    %619 = vmatpush1.msra.mxu0 %v568
    %620 = vmatprep.subr.mxu0 0.0
    %621 = vmatpush1.msra.mxu0 0.0
    %622 = vmatprep.subr.mxu0 0.0
    %623 = vmatpush1.msra.mxu0 0.0
    %624 = vmatprep.subr.mxu0 0.0
    %625 = vmatpush1.msra.mxu0 0.0
    %626 = vmatprep.subr.mxu0 0.0
    %627 = vmatpush1.msra.mxu0 0.0
    %628 = vmatprep.subr.mxu0 0.0
    %629 = vmatpush1.msra.mxu0 0.0
    %630 = vmatprep.subr.mxu0 0.0
    %631 = vmatpush1.msra.mxu0 0.0
    %632 = vmatprep.subr.mxu0 0.0
    %633 = vmatpush1.msra.mxu0 0.0
    %634 = vmatprep.subr.mxu0 0.0
    %635 = vmatpush1.msra.mxu0 0.0
    %636 = vmatprep.subr.mxu0 0.0
    %637 = vmatpush1.msra.mxu0 0.0
    %638 = vmatprep.subr.mxu0 0.0
    %639 = vmatpush1.msra.mxu0 0.0
    %640 = vmatprep.subr.mxu0 0.0
    %641 = vmatpush1.msra.mxu0 0.0
    %642 = vmatprep.subr.mxu0 0.0
    %643 = vmatpush1.msra.mxu0 0.0
    %644 = vmatprep.subr.mxu0 0.0
    %645 = vmatpush1.msra.mxu0 0.0
    %646 = vmatprep.subr.mxu0 0.0
    %647 = vmatpush1.msra.mxu0 0.0
    %648 = vmatprep.subr.mxu0 0.0
    %649 = vmatpush1.msra.mxu0 0.0
    %650 = vmatprep.subr.mxu0 0.0
    %651 = vmatpush1.msra.mxu0 0.0
    %652 = vmatprep.subr.mxu0 0.0
    %653 = vmatpush1.msra.mxu0 0.0
    %654 = vmatprep.subr.mxu0 0.0
    %655 = vmatpush1.msra.mxu0 0.0
    %656 = vmatprep.subr.mxu0 0.0
    %657 = vmatpush1.msra.mxu0 0.0
    %658 = vmatprep.subr.mxu0 0.0
    %659 = vmatpush1.msra.mxu0 0.0
    %660 = vmatprep.subr.mxu0 0.0
    %661 = vmatpush1.msra.mxu0 0.0
    %662 = vmatprep.subr.mxu0 0.0
    %663 = vmatpush1.msra.mxu0 0.0
    %664 = vmatprep.subr.mxu0 0.0
    %665 = vmatpush1.msra.mxu0 0.0
    %666 = vmatprep.subr.mxu0 0.0
    %667 = vmatpush1.msra.mxu0 0.0
    %668 = vmatprep.subr.mxu0 0.0
    %669 = vmatpush1.msra.mxu0 0.0
    %670 = vmatprep.subr.mxu0 0.0
    %671 = vmatpush1.msra.mxu0 0.0
    %672 = vmatprep.subr.mxu0 0.0
    %673 = vmatpush1.msra.mxu0 0.0
    %674 = vmatprep.subr.mxu0 0.0
    %675 = vmatpush1.msra.mxu0 0.0
    %676 = vmatprep.mubr.f32.mxu0 0.0
    %677 = vmatmul.mubr.f32.gmra.mrb[0].mxu0 %v601
    %v678 = vpop.f32.mrb[0].mxu0
    %v679 = vadd.f32 %v583, %v678
    %v680 = vpop.f32.mrb[0].mxu0
    %v681 = vadd.f32 %v583, %v680
    %682 = vmatprep.mubr.f32.mxu0 0.0
    %683 = vmatmul.mubr.f32.gmra.mrb[0].mxu0 %v604
    %v684 = vpop.f32.mrb[0].mxu0
    %v685 = vadd.f32 %v588, %v684
    %v686 = vpop.f32.mrb[0].mxu0
    %v687 = vadd.f32 %v588, %v686
    %688 = vmatprep.mubr.f32.mxu0 0.0
    %689 = vmatmul.mubr.f32.gmra.mrb[0].mxu0 %v607
    %v690 = vpop.f32.mrb[0].mxu0
    %v691 = vadd.f32 %v593, %v690
    %v692 = vpop.f32.mrb[0].mxu0
    %v693 = vadd.f32 %v593, %v692
    %694 = vmatprep.mubr.f32.mxu0 0.0
    %695 = vmatmul.mubr.f32.gmra.mrb[0].mxu0 %v610
    %v696 = vpop.f32.mrb[0].mxu0
    %v697 = vadd.f32 %v598, %v696
    %v698 = vpop.f32.mrb[0].mxu0
    %v699 = vadd.f32 %v598, %v698
    %700 = vdwg.mxu0
    %701 = vmatprep.subr.mxu0 %v559
    %702 = vmatpush1.msra.mxu0 %v558
    %703 = vmatprep.subr.mxu0 %v563
    %704 = vmatpush1.msra.mxu0 %v562
    %705 = vmatprep.subr.mxu0 %v567
    %706 = vmatpush1.msra.mxu0 %v566
    %707 = vmatprep.subr.mxu0 %v571
    %708 = vmatpush1.msra.mxu0 %v570
    %709 = vmatprep.subr.mxu0 0.0
    %710 = vmatpush1.msra.mxu0 0.0
    %711 = vmatprep.subr.mxu0 0.0
    %712 = vmatpush1.msra.mxu0 0.0
    %713 = vmatprep.subr.mxu0 0.0
    %714 = vmatpush1.msra.mxu0 0.0
    %715 = vmatprep.subr.mxu0 0.0
    %716 = vmatpush1.msra.mxu0 0.0
    %717 = vmatprep.subr.mxu0 0.0
    %718 = vmatpush1.msra.mxu0 0.0
    %719 = vmatprep.subr.mxu0 0.0
    %720 = vmatpush1.msra.mxu0 0.0
    %721 = vmatprep.subr.mxu0 0.0
    %722 = vmatpush1.msra.mxu0 0.0
    %723 = vmatprep.subr.mxu0 0.0
    %724 = vmatpush1.msra.mxu0 0.0
    %725 = vmatprep.subr.mxu0 0.0
    %726 = vmatpush1.msra.mxu0 0.0
    %727 = vmatprep.subr.mxu0 0.0
    %728 = vmatpush1.msra.mxu0 0.0
    %729 = vmatprep.subr.mxu0 0.0
    %730 = vmatpush1.msra.mxu0 0.0
    %731 = vmatprep.subr.mxu0 0.0
    %732 = vmatpush1.msra.mxu0 0.0
    %733 = vmatprep.subr.mxu0 0.0
    %734 = vmatpush1.msra.mxu0 0.0
    %735 = vmatprep.subr.mxu0 0.0
    %736 = vmatpush1.msra.mxu0 0.0
    %737 = vmatprep.subr.mxu0 0.0
    %738 = vmatpush1.msra.mxu0 0.0
    %739 = vmatprep.subr.mxu0 0.0
    %740 = vmatpush1.msra.mxu0 0.0
    %741 = vmatprep.subr.mxu0 0.0
    %742 = vmatpush1.msra.mxu0 0.0
    %743 = vmatprep.subr.mxu0 0.0
    %744 = vmatpush1.msra.mxu0 0.0
    %745 = vmatprep.subr.mxu0 0.0
    %746 = vmatpush1.msra.mxu0 0.0
    %747 = vmatprep.subr.mxu0 0.0
    %748 = vmatpush1.msra.mxu0 0.0
    %749 = vmatprep.subr.mxu0 0.0
    %750 = vmatpush1.msra.mxu0 0.0
    %751 = vmatprep.subr.mxu0 0.0
    %752 = vmatpush1.msra.mxu0 0.0
    %753 = vmatprep.subr.mxu0 0.0
    %754 = vmatpush1.msra.mxu0 0.0
    %755 = vmatprep.subr.mxu0 0.0
    %756 = vmatpush1.msra.mxu0 0.0
    %757 = vmatprep.subr.mxu0 0.0
    %758 = vmatpush1.msra.mxu0 0.0
    %759 = vmatprep.subr.mxu0 0.0
    %760 = vmatpush1.msra.mxu0 0.0
    %761 = vmatprep.subr.mxu0 0.0
    %762 = vmatpush1.msra.mxu0 0.0
    %763 = vmatprep.subr.mxu0 0.0
    %764 = vmatpush1.msra.mxu0 0.0
    %765 = vmatprep.mubr.f32.mxu0 0.0
    %766 = vmatmul.mubr.f32.gmra.mrb[0].mxu0 %v601
    %v767 = vpop.f32.mrb[0].mxu0
    %v768 = vadd.f32 %v583, %v767
    %v769 = vpop.f32.mrb[0].mxu0
    %v770 = vadd.f32 %v583, %v769
    %771 = vmatprep.mubr.f32.mxu0 0.0
    %772 = vmatmul.mubr.f32.gmra.mrb[0].mxu0 %v604
    %v773 = vpop.f32.mrb[0].mxu0
    %v774 = vadd.f32 %v588, %v773
    %v775 = vpop.f32.mrb[0].mxu0
    %v776 = vadd.f32 %v588, %v775
    %777 = vmatprep.mubr.f32.mxu0 0.0
    %778 = vmatmul.mubr.f32.gmra.mrb[0].mxu0 %v607
    %v779 = vpop.f32.mrb[0].mxu0
    %v780 = vadd.f32 %v593, %v779
    %v781 = vpop.f32.mrb[0].mxu0
    %v782 = vadd.f32 %v593, %v781
    %783 = vmatprep.mubr.f32.mxu0 0.0
    %784 = vmatmul.mubr.f32.gmra.mrb[0].mxu0 %v610
    %v785 = vpop.f32.mrb[0].mxu0
    %v786 = vadd.f32 %v598, %v785
    %v787 = vpop.f32.mrb[0].mxu0
    %v788 = vadd.f32 %v598, %v787
    %789 = vdwg.mxu0
    %v790 = vmax.f32 %v679, 0.0
    %v791 = vmax.f32 %v681, 0.0
    %v792 = vmax.f32 %v768, 0.0
    %v793 = vmax.f32 %v770, 0.0
    %v794 = vmax.f32 %v685, 0.0
    %v795 = vmax.f32 %v687, 0.0
    %v796 = vmax.f32 %v774, 0.0
    %v797 = vmax.f32 %v776, 0.0
    %v798 = vmax.f32 %v691, 0.0
    %v799 = vmax.f32 %v693, 0.0
    %v800 = vmax.f32 %v780, 0.0
    %v801 = vmax.f32 %v782, 0.0
    %v802 = vmax.f32 %v697, 0.0
    %v803 = vmax.f32 %v699, 0.0
    %v804 = vmax.f32 %v786, 0.0
    %v805 = vmax.f32 %v788, 0.0
    %v806 = vld [vmem:[%s7] sm:$0xf]
    %v807 = vld [vmem:[%s8] sm:$0xf]
    %809 = vset.pattern.permute.xlu0 0
    %810 = vperm.xlu0 %809, %v807
    %v811 = vpop.permute.xlu0 %810
    %v814 = vsel %vm365, %v806, 0
    %816 = vmatprep.subr.mxu0 %v791
    %817 = vmatpush1.msra.mxu0 %v790
    %818 = vmatprep.subr.mxu0 %v795
    %819 = vmatpush1.msra.mxu0 %v794
    %820 = vmatprep.subr.mxu0 %v799
    %821 = vmatpush1.msra.mxu0 %v798
    %822 = vmatprep.subr.mxu0 %v803
    %823 = vmatpush1.msra.mxu0 %v802
    %824 = vmatprep.subr.mxu0 0.0
    %825 = vmatpush1.msra.mxu0 0.0
    %826 = vmatprep.subr.mxu0 0.0
    %827 = vmatpush1.msra.mxu0 0.0
    %828 = vmatprep.subr.mxu0 0.0
    %829 = vmatpush1.msra.mxu0 0.0
    %830 = vmatprep.subr.mxu0 0.0
    %831 = vmatpush1.msra.mxu0 0.0
    %832 = vmatprep.subr.mxu0 0.0
    %833 = vmatpush1.msra.mxu0 0.0
    %834 = vmatprep.subr.mxu0 0.0
    %835 = vmatpush1.msra.mxu0 0.0
    %836 = vmatprep.subr.mxu0 0.0
    %837 = vmatpush1.msra.mxu0 0.0
    %838 = vmatprep.subr.mxu0 0.0
    %839 = vmatpush1.msra.mxu0 0.0
    %840 = vmatprep.subr.mxu0 0.0
    %841 = vmatpush1.msra.mxu0 0.0
    %842 = vmatprep.subr.mxu0 0.0
    %843 = vmatpush1.msra.mxu0 0.0
    %844 = vmatprep.subr.mxu0 0.0
    %845 = vmatpush1.msra.mxu0 0.0
    %846 = vmatprep.subr.mxu0 0.0
    %847 = vmatpush1.msra.mxu0 0.0
    %848 = vmatprep.subr.mxu0 0.0
    %849 = vmatpush1.msra.mxu0 0.0
    %850 = vmatprep.subr.mxu0 0.0
    %851 = vmatpush1.msra.mxu0 0.0
    %852 = vmatprep.subr.mxu0 0.0
    %853 = vmatpush1.msra.mxu0 0.0
    %854 = vmatprep.subr.mxu0 0.0
    %855 = vmatpush1.msra.mxu0 0.0
    %856 = vmatprep.subr.mxu0 0.0
    %857 = vmatpush1.msra.mxu0 0.0
    %858 = vmatprep.subr.mxu0 0.0
    %859 = vmatpush1.msra.mxu0 0.0
    %860 = vmatprep.subr.mxu0 0.0
    %861 = vmatpush1.msra.mxu0 0.0
    %862 = vmatprep.subr.mxu0 0.0
    %863 = vmatpush1.msra.mxu0 0.0
    %864 = vmatprep.subr.mxu0 0.0
    %865 = vmatpush1.msra.mxu0 0.0
    %866 = vmatprep.subr.mxu0 0.0
    %867 = vmatpush1.msra.mxu0 0.0
    %868 = vmatprep.subr.mxu0 0.0
    %869 = vmatpush1.msra.mxu0 0.0
    %870 = vmatprep.subr.mxu0 0.0
    %871 = vmatpush1.msra.mxu0 0.0
    %872 = vmatprep.subr.mxu0 0.0
    %873 = vmatpush1.msra.mxu0 0.0
    %874 = vmatprep.subr.mxu0 0.0
    %875 = vmatpush1.msra.mxu0 0.0
    %876 = vmatprep.subr.mxu0 0.0
    %877 = vmatpush1.msra.mxu0 0.0
    %878 = vmatprep.subr.mxu0 0.0
    %879 = vmatpush1.msra.mxu0 0.0
    %880 = vmatprep.mubr.f32.mxu0 0.0
    %881 = vmatmul.mubr.f32.gmra.mrb[0].mxu0 %v814
    %v882 = vpop.f32.mrb[0].mxu0
    %v883 = vadd.f32 %v811, %v882
    %v884 = vpop.f32.mrb[0].mxu0
    %v885 = vadd.f32 %v811, %v884
    %886 = vdwg.mxu0
    %887 = vmatprep.subr.mxu0 %v793
    %888 = vmatpush1.msra.mxu0 %v792
    %889 = vmatprep.subr.mxu0 %v797
    %890 = vmatpush1.msra.mxu0 %v796
    %891 = vmatprep.subr.mxu0 %v801
    %892 = vmatpush1.msra.mxu0 %v800
    %893 = vmatprep.subr.mxu0 %v805
    %894 = vmatpush1.msra.mxu0 %v804
    %895 = vmatprep.subr.mxu0 0.0
    %896 = vmatpush1.msra.mxu0 0.0
    %897 = vmatprep.subr.mxu0 0.0
    %898 = vmatpush1.msra.mxu0 0.0
    %899 = vmatprep.subr.mxu0 0.0
    %900 = vmatpush1.msra.mxu0 0.0
    %901 = vmatprep.subr.mxu0 0.0
    %902 = vmatpush1.msra.mxu0 0.0
    %903 = vmatprep.subr.mxu0 0.0
    %904 = vmatpush1.msra.mxu0 0.0
    %905 = vmatprep.subr.mxu0 0.0
    %906 = vmatpush1.msra.mxu0 0.0
    %907 = vmatprep.subr.mxu0 0.0
    %908 = vmatpush1.msra.mxu0 0.0
    %909 = vmatprep.subr.mxu0 0.0
    %910 = vmatpush1.msra.mxu0 0.0
    %911 = vmatprep.subr.mxu0 0.0
    %912 = vmatpush1.msra.mxu0 0.0
    %913 = vmatprep.subr.mxu0 0.0
    %914 = vmatpush1.msra.mxu0 0.0
    %915 = vmatprep.subr.mxu0 0.0
    %916 = vmatpush1.msra.mxu0 0.0
    %917 = vmatprep.subr.mxu0 0.0
    %918 = vmatpush1.msra.mxu0 0.0
    %919 = vmatprep.subr.mxu0 0.0
    %920 = vmatpush1.msra.mxu0 0.0
    %921 = vmatprep.subr.mxu0 0.0
    %922 = vmatpush1.msra.mxu0 0.0
    %923 = vmatprep.subr.mxu0 0.0
    %924 = vmatpush1.msra.mxu0 0.0
    %925 = vmatprep.subr.mxu0 0.0
    %926 = vmatpush1.msra.mxu0 0.0
    %927 = vmatprep.subr.mxu0 0.0
    %928 = vmatpush1.msra.mxu0 0.0
    %929 = vmatprep.subr.mxu0 0.0
    %930 = vmatpush1.msra.mxu0 0.0
    %931 = vmatprep.subr.mxu0 0.0
    %932 = vmatpush1.msra.mxu0 0.0
    %933 = vmatprep.subr.mxu0 0.0
    %934 = vmatpush1.msra.mxu0 0.0
    %935 = vmatprep.subr.mxu0 0.0
    %936 = vmatpush1.msra.mxu0 0.0
    %937 = vmatprep.subr.mxu0 0.0
    %938 = vmatpush1.msra.mxu0 0.0
    %939 = vmatprep.subr.mxu0 0.0
    %940 = vmatpush1.msra.mxu0 0.0
    %941 = vmatprep.subr.mxu0 0.0
    %942 = vmatpush1.msra.mxu0 0.0
    %943 = vmatprep.subr.mxu0 0.0
    %944 = vmatpush1.msra.mxu0 0.0
    %945 = vmatprep.subr.mxu0 0.0
    %946 = vmatpush1.msra.mxu0 0.0
    %947 = vmatprep.subr.mxu0 0.0
    %948 = vmatpush1.msra.mxu0 0.0
    %949 = vmatprep.subr.mxu0 0.0
    %950 = vmatpush1.msra.mxu0 0.0
    %951 = vmatprep.mubr.f32.mxu0 0.0
    %952 = vmatmul.mubr.f32.gmra.mrb[0].mxu0 %v814
    %v953 = vpop.f32.mrb[0].mxu0
    %v954 = vadd.f32 %v811, %v953
    %v955 = vpop.f32.mrb[0].mxu0
    %v956 = vadd.f32 %v811, %v955
    %957 = vdwg.mxu0
    %v962 = vcombine.low %v883, %v885
    %v963 = vcombine.low %v954, %v956
    %966 = vst [vmem:[#allocation2] sm:$0xff] %v962
    %967 = vst [vmem:[#allocation2 + $0x8] sm:$0xff] %v963
    // Predicated region
    $region38: #{tpu_custom_call.1} parent=1 // pred_check
      _
    $region39: #{tpu_custom_call.1} parent=1 // pred_check_branch
      %969 = sbr.rel (0) target = $region41
    $region40: #{tpu_custom_call.1} parent=1 // pred_region
      %s971 = ssub.s32 256, 64
      %972 = vsyncadd [#allocation3], %s971
      %s974 = sshll.u32 [#allocation2], 4
      %s975 = int_to_ptr.vmem [resolvable:$true] %s974
      %977 = dma.vmem_to_hbm [thread:$0]  %s975, 64, %s9, [#allocation3]
    $region41: #{tpu_custom_call.1} parent=1 // pred_fallthru
      _
    // Predicated region
    $region42: #{tpu_custom_call.1} parent=1 // pred_check
      _
    $region43: #{tpu_custom_call.1} parent=1 // pred_check_branch
      %979 = sbr.rel (0) target = $region45
    $region44: #{tpu_custom_call.1} parent=1 // pred_region
      %980 = dma.done [#allocation3], 256
    $region45: #{tpu_custom_call.1} parent=1 // pred_fallthru
      _
    %981 = vsyncpa [#allocation3], 1

</llo_original>
